<compile_context>
chip_gen: v7x
topology: tpu7x:2x2x1
jax: 0.10.0
libtpu: 0.0.40
codegen_flags: <defaults>
</compile_context>

<pallas_src>
import jax
import jax.numpy as jnp
from jax.experimental import pallas as pl
from jax.experimental.pallas import tpu as pltpu


_LANE = 128          # lane width: output N padded to a multiple of this
_TM_MAX = 256        # M tile when batch is large (v6e/v7x MXU row width)


def _linear_kernel(x_ref, w_ref, b_ref, o_ref):
    """o = x @ w + b  with x (tm, K), w (K, N_pad), b (1, N_pad): canonical MXU feed."""
    acc = jnp.dot(
        x_ref[...],                       # (tm, K)
        w_ref[...],                       # (K, N_pad), lane-dense N
        preferred_element_type=jnp.float32,
    )                                     # (tm, N_pad) f32 accumulation
    o_ref[...] = (acc + b_ref[...]).astype(o_ref.dtype)


def linear_pallas(x_flat, w, b):
    """y = x_flat @ w.T + b  with x_flat (B, K), w (N, K), b (N,)."""
    B, K = x_flat.shape
    N, Kw = w.shape
    assert K == Kw, "weight in_features must match flattened image size"

    # --- one-time wrapper-side layout prep (constant-folded / fused by XLA) ---
    # Pad N to a lane-dense multiple of 128 and pre-transpose w -> (K, N_pad).
    N_pad = max(_LANE, pl.cdiv(N, _LANE) * _LANE)
    w_t = jnp.zeros((K, N_pad), w.dtype).at[:, :N].set(w.T)
    b_pad = jnp.zeros((1, N_pad), b.dtype).at[0, :N].set(b)

    # --- M tiling: single block for small batch, 256-row tiles otherwise ---
    tm = B if B <= _TM_MAX else _TM_MAX
    B_pad = pl.cdiv(B, tm) * tm
    if B_pad != B:
        x_flat = jnp.pad(x_flat, ((0, B_pad - B), (0, 0)))
    grid = (B_pad // tm,)

    flops = 2 * B_pad * K * N_pad
    bytes_accessed = (B_pad * K + K * N_pad + N_pad + B_pad * N_pad) * 4

    out = pl.pallas_call(
        _linear_kernel,
        out_shape=jax.ShapeDtypeStruct((B_pad, N_pad), x_flat.dtype),
        grid_spec=pltpu.PrefetchScalarGridSpec(
            num_scalar_prefetch=0,
            grid=grid,
            in_specs=[
                pl.BlockSpec((tm, K), lambda i: (i, 0)),      # activations
                pl.BlockSpec((K, N_pad), lambda i: (0, 0)),   # weight (K, N_pad), lane-dense N
                pl.BlockSpec((1, N_pad), lambda i: (0, 0)),   # bias
            ],
            out_specs=pl.BlockSpec((tm, N_pad), lambda i: (i, 0)),
        ),
        compiler_params=pltpu.CompilerParams(
            # M axis is independent -> "parallel" lets megacore (v7x 2 TCs) split it.
            dimension_semantics=("parallel",),
        ),
        cost_estimate=pl.CostEstimate(
            flops=flops, transcendentals=0, bytes_accessed=bytes_accessed
        ),
    )(x_flat, w_t, b_pad)

    # Hand back only the real rows / real output features.
    return out[:B, :N]


def my_model_forward(image, w, b):
    """PyTorch-equivalent forward: flatten(start_dim=1) then Linear.

    image: (B, 5, H, W)   w: (output_dims, 5*H*W)   b: (output_dims,)
    returns: (B, output_dims)
    """
    B = image.shape[0]
    # Contiguous default layout -> this reshape is a copy-free bitcast in HLO.
    x_flat = image.reshape(B, -1)        # torch.flatten(image, start_dim=1)
    return linear_pallas(x_flat, w, b)


if __name__ == "__main__":
    # Small shapes consistent with the module: size=(16, 8), 5 input channels,
    # output_dims=4  -> in_features = 5*16*8 = 640.
    B, C, H, W = 8, 5, 16, 8
    output_dims = 4
    K = C * H * W

    key = jax.random.PRNGKey(0)
    k_img, k_w, k_b = jax.random.split(key, 3)

    image = jax.random.normal(k_img, (B, C, H, W), dtype=jnp.float32)
    # Deterministic parameter init (mimics nn.Linear's uniform(-1/sqrt(K), 1/sqrt(K)))
    bound = 1.0 / jnp.sqrt(jnp.float32(K))
    weight = jax.random.uniform(k_w, (output_dims, K), jnp.float32, -bound, bound)
    bias = jax.random.uniform(k_b, (output_dims,), jnp.float32, -bound, bound)

    out = my_model_forward(image, weight, bias)
    out = jax.block_until_ready(out)

    # Sanity check against a plain-JAX reference.
    ref = image.reshape(B, -1) @ weight.T + bias
    assert out.shape == (B, output_dims)
    assert jnp.allclose(out, ref, atol=1e-4, rtol=1e-4)

    print("KERNEL_OK")
</pallas_src>

<mosaic_0001>
module attributes {stable_mosaic.version = 11 : i64} {
  func.func @_linear_kernel(%arg0: i32, %arg1: memref<8x640xf32, #tpu.memory_space<vmem>>, %arg2: memref<640x128xf32, #tpu.memory_space<vmem>>, %arg3: memref<1x128xf32, #tpu.memory_space<vmem>>, %arg4: memref<8x128xf32, #tpu.memory_space<vmem>>) attributes {dimension_semantics = [#tpu.dimension_semantics<parallel>], iteration_bounds = array<i64: 1>, scalar_prefetch = 0 : i64, scratch_operands = 0 : i64, tpu.core_type = #tpu.core_type<tc>, window_params = [{transform_indices = @transform_0, window_bounds = array<i64: 8, 640>}, {pipeline_mode = #tpu.pipeline_mode<synchronous>, transform_indices = @transform_1, window_bounds = array<i64: 640, 128>}, {pipeline_mode = #tpu.pipeline_mode<synchronous>, transform_indices = @transform_2, window_bounds = array<i64: 1, 128>}, {transform_indices = @transform_3, window_bounds = array<i64: 8, 128>}]} {
    %c0 = arith.constant 0 : index
    %c0_0 = arith.constant 0 : index
    %0 = vector.load %arg1[%c0, %c0_0] : memref<8x640xf32, #tpu.memory_space<vmem>>, vector<8x640xf32>
    %c0_1 = arith.constant 0 : index
    %c0_2 = arith.constant 0 : index
    %1 = vector.load %arg2[%c0_1, %c0_2] : memref<640x128xf32, #tpu.memory_space<vmem>>, vector<640x128xf32>
    %cst = arith.constant dense<0.000000e+00> : vector<8x128xf32>
    %2 = tpu.matmul %0, %1, %cst {dimension_numbers = #tpu.dot_dimension_numbers<[1], [0], [0], [1], [0, 0, 1, 1], [], []>} : vector<8x640xf32>, vector<640x128xf32>, vector<8x128xf32> -> vector<8x128xf32>
    %c0_3 = arith.constant 0 : index
    %c0_4 = arith.constant 0 : index
    %3 = vector.load %arg3[%c0_3, %c0_4] : memref<1x128xf32, #tpu.memory_space<vmem>>, vector<1x128xf32>
    %4 = vector.broadcast %3 : vector<1x128xf32> to vector<8x128xf32>
    %5 = arith.addf %2, %4 : vector<8x128xf32>
    %c0_5 = arith.constant 0 : index
    %c0_6 = arith.constant 0 : index
    %6 = vector.load %arg4[%c0_5, %c0_6] : memref<8x128xf32, #tpu.memory_space<vmem>>, vector<8x128xf32>
    tpu.vector_store %arg4[%c0_5, %c0_6], %5 {strides = array<i32>} : memref<8x128xf32, #tpu.memory_space<vmem>>, vector<8x128xf32>,
    return
  }
  func.func @transform_0(%arg0: i32) -> (i32, i32) {
    %c0_i32 = arith.constant 0 : i32
    %c0_i32_0 = arith.constant 0 : i32
    return %arg0, %c0_i32 : i32, i32
  }
  func.func @transform_1(%arg0: i32) -> (i32, i32) {
    %c0_i32 = arith.constant 0 : i32
    %c0_i32_0 = arith.constant 0 : i32
    %c0_i32_1 = arith.constant 0 : i32
    return %c0_i32, %c0_i32_0 : i32, i32
  }
  func.func @transform_2(%arg0: i32) -> (i32, i32) {
    %c0_i32 = arith.constant 0 : i32
    %c0_i32_0 = arith.constant 0 : i32
    %c0_i32_1 = arith.constant 0 : i32
    return %c0_i32, %c0_i32_0 : i32, i32
  }
  func.func @transform_3(%arg0: i32) -> (i32, i32) {
    %c0_i32 = arith.constant 0 : i32
    %c0_i32_0 = arith.constant 0 : i32
    return %arg0, %c0_i32 : i32, i32
  }
}

</mosaic_0001>

<llo_original>
// kernel: tpu_custom_call.1
$region0: #{tpu_custom_call.1}
  #allocation0 [shape = 'u32[]', space=smem, size = 0x4, offset = 0x4, fixed_abs, tag = 'smem constant byte address 0x4 - core index']
  #allocation1 [shape = 'u32[144,128]{1,0:T(1,128)}', space=vmem, size = 0x12000, scoped, tag = 'internal scratch']
  %s0 = inlined_call_operand.hbm [shape: f32[8,640], index: 0, kind: input, shape index: {}]
  %s1 = inlined_call_operand.hbm [shape: f32[640,128], index: 1, kind: input, shape index: {}]
  %s2 = inlined_call_operand.vmem [shape: f32[1,128], index: 2, kind: input, shape index: {}]
  %s3 = inlined_call_operand.hbm [shape: f32[8,128], index: 3, kind: output, shape index: {}]
  %s4 = sld [smem:[#allocation0]]
  $region30: #{tpu_custom_call.1} parent=0
    _
  %s6 = ssub.s32 1, %s4
  %s7 = scalar_select 0, %s6, %s4
  $region1: #{tpu_custom_call.1} parent=0
    #allocation2 [shape = 'u8[20480]{0}', space=vmem, size = 0x5000, scoped, tag = 'input window, operand 0, single buffered']
    #allocation3 [shape = 's32[1]{0}', space=sflag, size = 0x4, scoped, tag = 'scoped memory for tpu_custom_call.1']
    #allocation4 [shape = 's32[1]{0}', space=sflag, size = 0x4, scoped, tag = 'scoped memory for tpu_custom_call.1']
    #allocation5 [shape = 'u8[327680]{0}', space=vmem, size = 0x50000, scoped, tag = 'input window, operand 1, single buffered']
    #allocation6 [shape = 's32[1]{0}', space=sflag, size = 0x4, scoped, tag = 'scoped memory for tpu_custom_call.1']
    #allocation7 [shape = 'u8[4096]{0}', space=vmem, size = 0x1000, scoped, tag = 'output window, operand 0, single buffered']
    %8 = vsyncpa [#allocation3], 0
    %9 = vsyncpa [#allocation6], 0
    %10 = vsyncpa [#allocation4], 0
    // Predicated region
    $region2: #{tpu_custom_call.1} parent=1 // pred_check
      _
    $region3: #{tpu_custom_call.1} parent=1 // pred_check_branch
      %12 = sbr.rel (0) target = $region5
    $region4: #{tpu_custom_call.1} parent=1 // pred_region
      %s14 = ssub.s32 640, 640
      %15 = vsyncadd [#allocation3], %s14
      %s17 = sshll.u32 [#allocation2], 4
      %s18 = int_to_ptr.vmem [resolvable:$true] %s17
      %20 = dma.hbm_to_vmem [thread:$0]  %s0, 640, %s18, [#allocation3]
    $region5: #{tpu_custom_call.1} parent=1 // pred_fallthru
      _
    // Predicated region
    $region6: #{tpu_custom_call.1} parent=1 // pred_check
      _
    $region7: #{tpu_custom_call.1} parent=1 // pred_check_branch
      %22 = sbr.rel (0) target = $region9
    $region8: #{tpu_custom_call.1} parent=1 // pred_region
      %s24 = ssub.s32 10240, 10240
      %25 = vsyncadd [#allocation6], %s24
      %s26 = sshll.u32 [#allocation5], 4
      %s27 = int_to_ptr.vmem [resolvable:$true] %s26
      %32 = dma.hbm_to_vmem [thread:$0]  %s1, 10240, %s27, [#allocation6], 128, 128, 8
    $region9: #{tpu_custom_call.1} parent=1 // pred_fallthru
      _
    // Predicated region
    $region10: #{tpu_custom_call.1} parent=1 // pred_check
      _
    $region11: #{tpu_custom_call.1} parent=1 // pred_check_branch
      %34 = sbr.rel (0) target = $region13
    $region12: #{tpu_custom_call.1} parent=1 // pred_region
      _
    $region13: #{tpu_custom_call.1} parent=1 // pred_fallthru
      _
    // Predicated region
    $region14: #{tpu_custom_call.1} parent=1 // pred_check
      _
    $region15: #{tpu_custom_call.1} parent=1 // pred_check_branch
      %36 = sbr.rel (0) target = $region17
    $region16: #{tpu_custom_call.1} parent=1 // pred_region
      %37 = dma.done [#allocation3], 640
    $region17: #{tpu_custom_call.1} parent=1 // pred_fallthru
      _
    // Predicated region
    $region18: #{tpu_custom_call.1} parent=1 // pred_check
      _
    $region19: #{tpu_custom_call.1} parent=1 // pred_check_branch
      %39 = sbr.rel (0) target = $region21
    $region20: #{tpu_custom_call.1} parent=1 // pred_region
      %40 = dma.done [#allocation6], 10240
    $region21: #{tpu_custom_call.1} parent=1 // pred_fallthru
      _
    %v41 = vld [vmem:[#allocation2] sm:$0xff]
    %v42 = vld [vmem:[#allocation2 + $0x8] sm:$0xff]
    %v43 = vld [vmem:[#allocation2 + $0x10] sm:$0xff]
    %v44 = vld [vmem:[#allocation2 + $0x18] sm:$0xff]
    %v45 = vld [vmem:[#allocation2 + $0x20] sm:$0xff]
    %v46 = vld [vmem:[#allocation5] sm:$0xff]
    %v47 = vld [vmem:[#allocation5 + $0x8] sm:$0xff]
    %v48 = vld [vmem:[#allocation5 + $0x10] sm:$0xff]
    %v49 = vld [vmem:[#allocation5 + $0x18] sm:$0xff]
    %v50 = vld [vmem:[#allocation5 + $0x20] sm:$0xff]
    %v51 = vld [vmem:[#allocation5 + $0x28] sm:$0xff]
    %v52 = vld [vmem:[#allocation5 + $0x30] sm:$0xff]
    %v53 = vld [vmem:[#allocation5 + $0x38] sm:$0xff]
    %v54 = vld [vmem:[#allocation5 + $0x40] sm:$0xff]
    %v55 = vld [vmem:[#allocation5 + $0x48] sm:$0xff]
    %v56 = vld [vmem:[#allocation5 + $0x50] sm:$0xff]
    %v57 = vld [vmem:[#allocation5 + $0x58] sm:$0xff]
    %v58 = vld [vmem:[#allocation5 + $0x60] sm:$0xff]
    %v59 = vld [vmem:[#allocation5 + $0x68] sm:$0xff]
    %v60 = vld [vmem:[#allocation5 + $0x70] sm:$0xff]
    %v61 = vld [vmem:[#allocation5 + $0x78] sm:$0xff]
    %v62 = vld [vmem:[#allocation5 + $0x80] sm:$0xff]
    %v63 = vld [vmem:[#allocation5 + $0x88] sm:$0xff]
    %v64 = vld [vmem:[#allocation5 + $0x90] sm:$0xff]
    %v65 = vld [vmem:[#allocation5 + $0x98] sm:$0xff]
    %v66 = vld [vmem:[#allocation5 + $0xa0] sm:$0xff]
    %v67 = vld [vmem:[#allocation5 + $0xa8] sm:$0xff]
    %v68 = vld [vmem:[#allocation5 + $0xb0] sm:$0xff]
    %v69 = vld [vmem:[#allocation5 + $0xb8] sm:$0xff]
    %v70 = vld [vmem:[#allocation5 + $0xc0] sm:$0xff]
    %v71 = vld [vmem:[#allocation5 + $0xc8] sm:$0xff]
    %v72 = vld [vmem:[#allocation5 + $0xd0] sm:$0xff]
    %v73 = vld [vmem:[#allocation5 + $0xd8] sm:$0xff]
    %v74 = vld [vmem:[#allocation5 + $0xe0] sm:$0xff]
    %v75 = vld [vmem:[#allocation5 + $0xe8] sm:$0xff]
    %v76 = vld [vmem:[#allocation5 + $0xf0] sm:$0xff]
    %v77 = vld [vmem:[#allocation5 + $0xf8] sm:$0xff]
    %v78 = vld [vmem:[#allocation5 + $0x100] sm:$0xff]
    %v79 = vld [vmem:[#allocation5 + $0x108] sm:$0xff]
    %v80 = vld [vmem:[#allocation5 + $0x110] sm:$0xff]
    %v81 = vld [vmem:[#allocation5 + $0x118] sm:$0xff]
    %v82 = vld [vmem:[#allocation5 + $0x120] sm:$0xff]
    %v83 = vld [vmem:[#allocation5 + $0x128] sm:$0xff]
    %v84 = vld [vmem:[#allocation5 + $0x130] sm:$0xff]
    %v85 = vld [vmem:[#allocation5 + $0x138] sm:$0xff]
    %v86 = vld [vmem:[#allocation5 + $0x140] sm:$0xff]
    %v87 = vld [vmem:[#allocation5 + $0x148] sm:$0xff]
    %v88 = vld [vmem:[#allocation5 + $0x150] sm:$0xff]
    %v89 = vld [vmem:[#allocation5 + $0x158] sm:$0xff]
    %v90 = vld [vmem:[#allocation5 + $0x160] sm:$0xff]
    %v91 = vld [vmem:[#allocation5 + $0x168] sm:$0xff]
    %v92 = vld [vmem:[#allocation5 + $0x170] sm:$0xff]
    %v93 = vld [vmem:[#allocation5 + $0x178] sm:$0xff]
    %v94 = vld [vmem:[#allocation5 + $0x180] sm:$0xff]
    %v95 = vld [vmem:[#allocation5 + $0x188] sm:$0xff]
    %v96 = vld [vmem:[#allocation5 + $0x190] sm:$0xff]
    %v97 = vld [vmem:[#allocation5 + $0x198] sm:$0xff]
    %v98 = vld [vmem:[#allocation5 + $0x1a0] sm:$0xff]
    %v99 = vld [vmem:[#allocation5 + $0x1a8] sm:$0xff]
    %v100 = vld [vmem:[#allocation5 + $0x1b0] sm:$0xff]
    %v101 = vld [vmem:[#allocation5 + $0x1b8] sm:$0xff]
    %v102 = vld [vmem:[#allocation5 + $0x1c0] sm:$0xff]
    %v103 = vld [vmem:[#allocation5 + $0x1c8] sm:$0xff]
    %v104 = vld [vmem:[#allocation5 + $0x1d0] sm:$0xff]
    %v105 = vld [vmem:[#allocation5 + $0x1d8] sm:$0xff]
    %v106 = vld [vmem:[#allocation5 + $0x1e0] sm:$0xff]
    %v107 = vld [vmem:[#allocation5 + $0x1e8] sm:$0xff]
    %v108 = vld [vmem:[#allocation5 + $0x1f0] sm:$0xff]
    %v109 = vld [vmem:[#allocation5 + $0x1f8] sm:$0xff]
    %v110 = vld [vmem:[#allocation5 + $0x200] sm:$0xff]
    %v111 = vld [vmem:[#allocation5 + $0x208] sm:$0xff]
    %v112 = vld [vmem:[#allocation5 + $0x210] sm:$0xff]
    %v113 = vld [vmem:[#allocation5 + $0x218] sm:$0xff]
    %v114 = vld [vmem:[#allocation5 + $0x220] sm:$0xff]
    %v115 = vld [vmem:[#allocation5 + $0x228] sm:$0xff]
    %v116 = vld [vmem:[#allocation5 + $0x230] sm:$0xff]
    %v117 = vld [vmem:[#allocation5 + $0x238] sm:$0xff]
    %v118 = vld [vmem:[#allocation5 + $0x240] sm:$0xff]
    %v119 = vld [vmem:[#allocation5 + $0x248] sm:$0xff]
    %v120 = vld [vmem:[#allocation5 + $0x250] sm:$0xff]
    %v121 = vld [vmem:[#allocation5 + $0x258] sm:$0xff]
    %v122 = vld [vmem:[#allocation5 + $0x260] sm:$0xff]
    %v123 = vld [vmem:[#allocation5 + $0x268] sm:$0xff]
    %v124 = vld [vmem:[#allocation5 + $0x270] sm:$0xff]
    %v125 = vld [vmem:[#allocation5 + $0x278] sm:$0xff]
    %v126 = vld [vmem:[%s2] sm:$0x1]
    %v128 = vlaneseq
    %v129 = vshrl.u32 %v128, 7
    %v130 = vsub.s32 0, %v129
    %v131 = vrot.slane %v126, %v130
    %133 = vmatprep.subr.mxu0 0.0
    %134 = vmatpush1.msra.mxu0 %v46
    %135 = vmatprep.subr.mxu0 0.0
    %136 = vmatpush1.msra.mxu0 %v47
    %137 = vmatprep.subr.mxu0 0.0
    %138 = vmatpush1.msra.mxu0 %v48
    %139 = vmatprep.subr.mxu0 0.0
    %140 = vmatpush1.msra.mxu0 %v49
    %141 = vmatprep.subr.mxu0 0.0
    %142 = vmatpush1.msra.mxu0 %v50
    %143 = vmatprep.subr.mxu0 0.0
    %144 = vmatpush1.msra.mxu0 %v51
    %145 = vmatprep.subr.mxu0 0.0
    %146 = vmatpush1.msra.mxu0 %v52
    %147 = vmatprep.subr.mxu0 0.0
    %148 = vmatpush1.msra.mxu0 %v53
    %149 = vmatprep.subr.mxu0 0.0
    %150 = vmatpush1.msra.mxu0 %v54
    %151 = vmatprep.subr.mxu0 0.0
    %152 = vmatpush1.msra.mxu0 %v55
    %153 = vmatprep.subr.mxu0 0.0
    %154 = vmatpush1.msra.mxu0 %v56
    %155 = vmatprep.subr.mxu0 0.0
    %156 = vmatpush1.msra.mxu0 %v57
    %157 = vmatprep.subr.mxu0 0.0
    %158 = vmatpush1.msra.mxu0 %v58
    %159 = vmatprep.subr.mxu0 0.0
    %160 = vmatpush1.msra.mxu0 %v59
    %161 = vmatprep.subr.mxu0 0.0
    %162 = vmatpush1.msra.mxu0 %v60
    %163 = vmatprep.subr.mxu0 0.0
    %164 = vmatpush1.msra.mxu0 %v61
    %165 = vmatprep.subr.mxu0 0.0
    %166 = vmatpush1.msra.mxu0 %v62
    %167 = vmatprep.subr.mxu0 0.0
    %168 = vmatpush1.msra.mxu0 %v63
    %169 = vmatprep.subr.mxu0 0.0
    %170 = vmatpush1.msra.mxu0 %v64
    %171 = vmatprep.subr.mxu0 0.0
    %172 = vmatpush1.msra.mxu0 %v65
    %173 = vmatprep.subr.mxu0 0.0
    %174 = vmatpush1.msra.mxu0 %v66
    %175 = vmatprep.subr.mxu0 0.0
    %176 = vmatpush1.msra.mxu0 %v67
    %177 = vmatprep.subr.mxu0 0.0
    %178 = vmatpush1.msra.mxu0 %v68
    %179 = vmatprep.subr.mxu0 0.0
    %180 = vmatpush1.msra.mxu0 %v69
    %181 = vmatprep.subr.mxu0 0.0
    %182 = vmatpush1.msra.mxu0 %v70
    %183 = vmatprep.subr.mxu0 0.0
    %184 = vmatpush1.msra.mxu0 %v71
    %185 = vmatprep.subr.mxu0 0.0
    %186 = vmatpush1.msra.mxu0 %v72
    %187 = vmatprep.subr.mxu0 0.0
    %188 = vmatpush1.msra.mxu0 %v73
    %189 = vmatprep.subr.mxu0 0.0
    %190 = vmatpush1.msra.mxu0 %v74
    %191 = vmatprep.subr.mxu0 0.0
    %192 = vmatpush1.msra.mxu0 %v75
    %193 = vmatprep.subr.mxu0 0.0
    %194 = vmatpush1.msra.mxu0 %v76
    %195 = vmatprep.subr.mxu0 0.0
    %196 = vmatpush1.msra.mxu0 %v77
    %197 = vmatprep.mubr.f32.mxu0 %v42
    %198 = vmatmul.mubr.f32.gmra.mrb[0].mxu0 %v41
    %v199 = vpop.f32.mrb[0].mxu0
    %v200 = vadd.f32 %v131, %v199
    %v201 = vpop.f32.mrb[0].mxu0
    %202 = vdwg.mxu0
    %203 = vmatprep.subr.mxu0 0.0
    %204 = vmatpush1.msra.mxu0 %v78
    %205 = vmatprep.subr.mxu0 0.0
    %206 = vmatpush1.msra.mxu0 %v79
    %207 = vmatprep.subr.mxu0 0.0
    %208 = vmatpush1.msra.mxu0 %v80
    %209 = vmatprep.subr.mxu0 0.0
    %210 = vmatpush1.msra.mxu0 %v81
    %211 = vmatprep.subr.mxu0 0.0
    %212 = vmatpush1.msra.mxu0 %v82
    %213 = vmatprep.subr.mxu0 0.0
    %214 = vmatpush1.msra.mxu0 %v83
    %215 = vmatprep.subr.mxu0 0.0
    %216 = vmatpush1.msra.mxu0 %v84
    %217 = vmatprep.subr.mxu0 0.0
    %218 = vmatpush1.msra.mxu0 %v85
    %219 = vmatprep.subr.mxu0 0.0
    %220 = vmatpush1.msra.mxu0 %v86
    %221 = vmatprep.subr.mxu0 0.0
    %222 = vmatpush1.msra.mxu0 %v87
    %223 = vmatprep.subr.mxu0 0.0
    %224 = vmatpush1.msra.mxu0 %v88
    %225 = vmatprep.subr.mxu0 0.0
    %226 = vmatpush1.msra.mxu0 %v89
    %227 = vmatprep.subr.mxu0 0.0
    %228 = vmatpush1.msra.mxu0 %v90
    %229 = vmatprep.subr.mxu0 0.0
    %230 = vmatpush1.msra.mxu0 %v91
    %231 = vmatprep.subr.mxu0 0.0
    %232 = vmatpush1.msra.mxu0 %v92
    %233 = vmatprep.subr.mxu0 0.0
    %234 = vmatpush1.msra.mxu0 %v93
    %235 = vmatprep.subr.mxu0 0.0
    %236 = vmatpush1.msra.mxu0 %v94
    %237 = vmatprep.subr.mxu0 0.0
    %238 = vmatpush1.msra.mxu0 %v95
    %239 = vmatprep.subr.mxu0 0.0
    %240 = vmatpush1.msra.mxu0 %v96
    %241 = vmatprep.subr.mxu0 0.0
    %242 = vmatpush1.msra.mxu0 %v97
    %243 = vmatprep.subr.mxu0 0.0
    %244 = vmatpush1.msra.mxu0 %v98
    %245 = vmatprep.subr.mxu0 0.0
    %246 = vmatpush1.msra.mxu0 %v99
    %247 = vmatprep.subr.mxu0 0.0
    %248 = vmatpush1.msra.mxu0 %v100
    %249 = vmatprep.subr.mxu0 0.0
    %250 = vmatpush1.msra.mxu0 %v101
    %251 = vmatprep.subr.mxu0 0.0
    %252 = vmatpush1.msra.mxu0 %v102
    %253 = vmatprep.subr.mxu0 0.0
    %254 = vmatpush1.msra.mxu0 %v103
    %255 = vmatprep.subr.mxu0 0.0
    %256 = vmatpush1.msra.mxu0 %v104
    %257 = vmatprep.subr.mxu0 0.0
    %258 = vmatpush1.msra.mxu0 %v105
    %259 = vmatprep.subr.mxu0 0.0
    %260 = vmatpush1.msra.mxu0 %v106
    %261 = vmatprep.subr.mxu0 0.0
    %262 = vmatpush1.msra.mxu0 %v107
    %263 = vmatprep.subr.mxu0 0.0
    %264 = vmatpush1.msra.mxu0 %v108
    %265 = vmatprep.subr.mxu0 0.0
    %266 = vmatpush1.msra.mxu0 %v109
    %267 = vmatprep.mubr.f32.mxu0 %v44
    %268 = vmatmul.mubr.f32.gmra.mrb[0].mxu0 %v43
    %v269 = vpop.f32.mrb[0].mxu0
    %v270 = vadd.f32 %v200, %v269
    %v271 = vpop.f32.mrb[0].mxu0
    %272 = vdwg.mxu0
    %273 = vmatprep.subr.mxu0 0.0
    %274 = vmatpush1.msra.mxu0 %v110
    %275 = vmatprep.subr.mxu0 0.0
    %276 = vmatpush1.msra.mxu0 %v111
    %277 = vmatprep.subr.mxu0 0.0
    %278 = vmatpush1.msra.mxu0 %v112
    %279 = vmatprep.subr.mxu0 0.0
    %280 = vmatpush1.msra.mxu0 %v113
    %281 = vmatprep.subr.mxu0 0.0
    %282 = vmatpush1.msra.mxu0 %v114
    %283 = vmatprep.subr.mxu0 0.0
    %284 = vmatpush1.msra.mxu0 %v115
    %285 = vmatprep.subr.mxu0 0.0
    %286 = vmatpush1.msra.mxu0 %v116
    %287 = vmatprep.subr.mxu0 0.0
    %288 = vmatpush1.msra.mxu0 %v117
    %289 = vmatprep.subr.mxu0 0.0
    %290 = vmatpush1.msra.mxu0 %v118
    %291 = vmatprep.subr.mxu0 0.0
    %292 = vmatpush1.msra.mxu0 %v119
    %293 = vmatprep.subr.mxu0 0.0
    %294 = vmatpush1.msra.mxu0 %v120
    %295 = vmatprep.subr.mxu0 0.0
    %296 = vmatpush1.msra.mxu0 %v121
    %297 = vmatprep.subr.mxu0 0.0
    %298 = vmatpush1.msra.mxu0 %v122
    %299 = vmatprep.subr.mxu0 0.0
    %300 = vmatpush1.msra.mxu0 %v123
    %301 = vmatprep.subr.mxu0 0.0
    %302 = vmatpush1.msra.mxu0 %v124
    %303 = vmatprep.subr.mxu0 0.0
    %304 = vmatpush1.msra.mxu0 %v125
    %305 = vmatprep.subr.mxu0 0.0
    %306 = vmatpush1.msra.mxu0 0.0
    %307 = vmatprep.subr.mxu0 0.0
    %308 = vmatpush1.msra.mxu0 0.0
    %309 = vmatprep.subr.mxu0 0.0
    %310 = vmatpush1.msra.mxu0 0.0
    %311 = vmatprep.subr.mxu0 0.0
    %312 = vmatpush1.msra.mxu0 0.0
    %313 = vmatprep.subr.mxu0 0.0
    %314 = vmatpush1.msra.mxu0 0.0
    %315 = vmatprep.subr.mxu0 0.0
    %316 = vmatpush1.msra.mxu0 0.0
    %317 = vmatprep.subr.mxu0 0.0
    %318 = vmatpush1.msra.mxu0 0.0
    %319 = vmatprep.subr.mxu0 0.0
    %320 = vmatpush1.msra.mxu0 0.0
    %321 = vmatprep.subr.mxu0 0.0
    %322 = vmatpush1.msra.mxu0 0.0
    %323 = vmatprep.subr.mxu0 0.0
    %324 = vmatpush1.msra.mxu0 0.0
    %325 = vmatprep.subr.mxu0 0.0
    %326 = vmatpush1.msra.mxu0 0.0
    %327 = vmatprep.subr.mxu0 0.0
    %328 = vmatpush1.msra.mxu0 0.0
    %329 = vmatprep.subr.mxu0 0.0
    %330 = vmatpush1.msra.mxu0 0.0
    %331 = vmatprep.subr.mxu0 0.0
    %332 = vmatpush1.msra.mxu0 0.0
    %333 = vmatprep.subr.mxu0 0.0
    %334 = vmatpush1.msra.mxu0 0.0
    %335 = vmatprep.subr.mxu0 0.0
    %336 = vmatpush1.msra.mxu0 0.0
    %337 = vmatprep.mubr.f32.mxu0 0.0
    %338 = vmatmul.mubr.f32.gmra.mrb[0].mxu0 %v45
    %v339 = vpop.f32.mrb[0].mxu0
    %v340 = vadd.f32 %v270, %v339
    %v341 = vpop.f32.mrb[0].mxu0
    %342 = vdwg.mxu0
    %343 = vst [vmem:[#allocation7] sm:$0xff] %v340
    // Predicated region
    $region22: #{tpu_custom_call.1} parent=1 // pred_check
      _
    $region23: #{tpu_custom_call.1} parent=1 // pred_check_branch
      %345 = sbr.rel (0) target = $region25
    $region24: #{tpu_custom_call.1} parent=1 // pred_region
      %s347 = ssub.s32 128, 128
      %348 = vsyncadd [#allocation4], %s347
      %s350 = sshll.u32 [#allocation7], 4
      %s351 = int_to_ptr.vmem [resolvable:$true] %s350
      %353 = dma.vmem_to_hbm [thread:$0]  %s351, 128, %s3, [#allocation4]
    $region25: #{tpu_custom_call.1} parent=1 // pred_fallthru
      _
    // Predicated region
    $region26: #{tpu_custom_call.1} parent=1 // pred_check
      _
    $region27: #{tpu_custom_call.1} parent=1 // pred_check_branch
      %355 = sbr.rel (0) target = $region29
    $region28: #{tpu_custom_call.1} parent=1 // pred_region
      %356 = dma.done [#allocation4], 128
    $region29: #{tpu_custom_call.1} parent=1 // pred_fallthru
      _
    %357 = vsyncpa [#allocation3], 1
    %358 = vsyncpa [#allocation6], 1
    %359 = vsyncpa [#allocation4], 1

</llo_original>
